<compile_context>
chip_gen: v5e
topology: v5e:2x2
jax: 0.10.0
libtpu: 0.0.40
codegen_flags: <defaults>
</compile_context>

<pallas_src>
import math

import jax
import jax.numpy as jnp
import numpy as np
from jax.experimental import pallas as pl
from jax.experimental.pallas import tpu as pltpu


def mil_kernel(x_ref, wc_ref, bc_ref, w1_ref, b1_ref, w2_ref, b2_ref, out_ref):
    # Conv(1->10, 3x3, 'same') over the 2x4 input as one (TB,8)@(8,80) matmul.
    conv = jnp.dot(x_ref[...], wc_ref[...],
                   preferred_element_type=jnp.float32) + bc_ref[...]
    conv = jnp.maximum(conv, 0.0)
    # 2x2 max-pool (stride 2) == max over the four 20-lane groups.
    # Result lanes are ordered c*2 + wpool, i.e. the PyTorch flatten order.
    feat = jnp.maximum(jnp.maximum(conv[:, 0:20], conv[:, 20:40]),
                       jnp.maximum(conv[:, 40:60], conv[:, 60:80]))
    # Linear(20 -> 500) + ReLU, single matmul.
    hidden = jnp.maximum(
        jnp.dot(feat, w1_ref[...], preferred_element_type=jnp.float32)
        + b1_ref[...], 0.0)
    # Linear(500 -> 2) + Softmax.  Classifier weights are pre-differenced so
    # the softmax is just an elementwise sigmoid (no cross-lane ops).
    d = jnp.dot(hidden, w2_ref[...],
                preferred_element_type=jnp.float32) + b2_ref[...]
    out_ref[...] = 1.0 / (1.0 + jnp.exp(-d))


def _round_up(v, m):
    return (v + m - 1) // m * m


def _pack_params(params):
    """Repack PyTorch-layout parameters for the kernel."""
    wc, bc = params["wc"], params["bc"]
    w1, b1 = params["w1"], params["b1"]
    w2, b2 = params["w2"], params["b2"]

    # Dense conv matrix Acat (8, 80):
    #   Acat[i*4 + j, jj*20 + c*2 + wpool] = wc[c, 0, kh, kw]
    # where (h_out, w_out) is the jj-th position inside pool window wpool,
    # kh = i - h_out + 1, kw = j - w_out + 1 (0 outside the 3x3 kernel, which
    # is exactly the 'same' zero padding).
    wcpad = jnp.pad(wc[:, 0], ((0, 0), (0, 0), (2, 2)))          # (10, 3, 7)
    ho = np.arange(2)[:, None, None, None]                       # h_out
    wo = np.arange(4)[None, :, None, None]                       # w_out
    ii = np.arange(2)[None, None, :, None]                       # input row
    jj = np.arange(4)[None, None, None, :]                       # input col
    kh = ii - ho + 1                                              # always in [0, 3)
    kw = jj - wo + 3                                              # index into padded axis
    a = wcpad[:, kh, kw]                                          # (10,2,4,2,4) [c,ho,wo,i,j]
    a = a.reshape(10, 2, 2, 2, 2, 4)                              # [c,ho,wp,ws,i,j]
    a = a.transpose(4, 5, 1, 3, 0, 2)                             # [i,j,ho,ws,c,wp]
    acat = a.reshape(8, 80)                                       # row i*4+j, col jj*20+c*2+wp
    b80 = jnp.tile(jnp.repeat(bc, 2), 4).reshape(1, 80)

    w1t = w1.T                                                    # (20, 500)
    b1r = b1.reshape(1, 500)

    # softmax over 2 classes == sigmoid of pairwise logit differences.
    w2d = jnp.stack([w2[0] - w2[1], w2[1] - w2[0]], axis=1)       # (500, 2)
    b2d = jnp.stack([b2[0] - b2[1], b2[1] - b2[0]]).reshape(1, 2)
    return acat, b80, w1t, b1r, w2d, b2d


def mil_forward(x, params):
    N = x.shape[0]
    assert x.shape[1:] == (1, 2, 4), x.shape
    x_flat = x.reshape(N, 8)

    # Batch tile: multiple of 8 (keeps pooling/stores sublane-aligned),
    # capped at 512 so double-buffered blocks + the (TB,500) hidden stay well
    # under v7x's smaller scoped-VMEM budget.
    tb = min(512, _round_up(N, 8))
    n_pad = _round_up(N, tb)
    if n_pad != N:
        x_flat = jnp.pad(x_flat, ((0, n_pad - N), (0, 0)))

    weights = _pack_params(params)

    def _full_spec(shape):
        nd = len(shape)
        return pl.BlockSpec(shape, lambda i, _nd=nd: (0,) * _nd)

    out = pl.pallas_call(
        mil_kernel,
        out_shape=jax.ShapeDtypeStruct((n_pad, 2), jnp.float32),
        grid=(n_pad // tb,),
        in_specs=[pl.BlockSpec((tb, 8), lambda i: (i, 0))]
                 + [_full_spec(w.shape) for w in weights],
        out_specs=pl.BlockSpec((tb, 2), lambda i: (i, 0)),
        compiler_params=pltpu.CompilerParams(
            dimension_semantics=("parallel",)),
    )(x_flat, *weights)
    return out[:N]


def init_params(key):
    ks = jax.random.split(key, 6)
    return dict(
        wc=jax.random.normal(ks[0], (10, 1, 3, 3), jnp.float32) * 0.2,
        bc=jax.random.normal(ks[1], (10,), jnp.float32) * 0.1,
        w1=jax.random.normal(ks[2], (500, 20), jnp.float32) * 0.1,
        b1=jax.random.normal(ks[3], (500,), jnp.float32) * 0.1,
        w2=jax.random.normal(ks[4], (2, 500), jnp.float32) * 0.05,
        b2=jax.random.normal(ks[5], (2,), jnp.float32) * 0.05,
    )


def ref_forward(x, params):
    """Pure-JAX reference mirroring the PyTorch forward exactly."""
    wc, bc = params["wc"], params["bc"]
    w1, b1 = params["w1"], params["b1"]
    w2, b2 = params["w2"], params["b2"]
    N = x.shape[0]
    xpad = jnp.pad(x[:, 0], ((0, 0), (1, 1), (1, 1)))            # (N, 4, 6)
    conv = jnp.zeros((N, 10, 2, 4), jnp.float32)
    for kh in range(3):
        for kw in range(3):
            conv = conv + (wc[None, :, 0, kh, kw, None, None]
                           * xpad[:, None, kh:kh + 2, kw:kw + 4])
    conv = jnp.maximum(conv + bc[None, :, None, None], 0.0)
    pooled = jnp.max(conv.reshape(N, 10, 1, 2, 2, 2), axis=(3, 5))  # (N,10,1,2)
    feat = pooled.reshape(N, 20)
    hidden = jnp.maximum(feat @ w1.T + b1, 0.0)
    logits = hidden @ w2.T + b2
    return jax.nn.softmax(logits, axis=-1)


if __name__ == "__main__":
    kmers_len = 2
    max_pool_output = math.floor((math.pow(2, kmers_len) - 2) / 2) + 1
    assert 10 * max_pool_output == 20

    key = jax.random.PRNGKey(0)
    kx, kp = jax.random.split(key)
    x = jax.random.normal(kx, (8, 1, 2, 2 ** kmers_len), jnp.float32)
    params = init_params(kp)

    out = mil_forward(x, params)
    out = jax.block_until_ready(out)

    ref = ref_forward(x, params)
    assert out.shape == (8, 2)
    if not jnp.allclose(out, ref, atol=1e-4, rtol=1e-4):
        raise AssertionError("Pallas kernel output does not match reference")
    print("KERNEL_OK")
</pallas_src>

<mosaic_0001>
module attributes {stable_mosaic.version = 11 : i64} {
  func.func @mil_kernel(%arg0: i32, %arg1: memref<8x8xf32, #tpu.memory_space<vmem>>, %arg2: memref<8x80xf32, #tpu.memory_space<vmem>>, %arg3: memref<1x80xf32, #tpu.memory_space<vmem>>, %arg4: memref<20x500xf32, #tpu.memory_space<vmem>>, %arg5: memref<1x500xf32, #tpu.memory_space<vmem>>, %arg6: memref<500x2xf32, #tpu.memory_space<vmem>>, %arg7: memref<1x2xf32, #tpu.memory_space<vmem>>, %arg8: memref<8x2xf32, #tpu.memory_space<vmem>>) attributes {dimension_semantics = [#tpu.dimension_semantics<parallel>], iteration_bounds = array<i64: 1>, scalar_prefetch = 0 : i64, scratch_operands = 0 : i64, tpu.core_type = #tpu.core_type<tc>, window_params = [{transform_indices = @transform_0, window_bounds = array<i64: 8, 8>}, {pipeline_mode = #tpu.pipeline_mode<synchronous>, transform_indices = @transform_1, window_bounds = array<i64: 8, 80>}, {pipeline_mode = #tpu.pipeline_mode<synchronous>, transform_indices = @transform_2, window_bounds = array<i64: 1, 80>}, {pipeline_mode = #tpu.pipeline_mode<synchronous>, transform_indices = @transform_3, window_bounds = array<i64: 20, 500>}, {pipeline_mode = #tpu.pipeline_mode<synchronous>, transform_indices = @transform_4, window_bounds = array<i64: 1, 500>}, {pipeline_mode = #tpu.pipeline_mode<synchronous>, transform_indices = @transform_5, window_bounds = array<i64: 500, 2>}, {pipeline_mode = #tpu.pipeline_mode<synchronous>, transform_indices = @transform_6, window_bounds = array<i64: 1, 2>}, {transform_indices = @transform_7, window_bounds = array<i64: 8, 2>}]} {
    %c0 = arith.constant 0 : index
    %c0_0 = arith.constant 0 : index
    %0 = vector.load %arg1[%c0, %c0_0] : memref<8x8xf32, #tpu.memory_space<vmem>>, vector<8x8xf32>
    %c0_1 = arith.constant 0 : index
    %c0_2 = arith.constant 0 : index
    %1 = vector.load %arg2[%c0_1, %c0_2] : memref<8x80xf32, #tpu.memory_space<vmem>>, vector<8x80xf32>
    %cst = arith.constant dense<0.000000e+00> : vector<8x80xf32>
    %2 = tpu.matmul %0, %1, %cst {dimension_numbers = #tpu.dot_dimension_numbers<[1], [0], [0], [1], [0, 0, 1, 1], [], []>} : vector<8x8xf32>, vector<8x80xf32>, vector<8x80xf32> -> vector<8x80xf32>
    %c0_3 = arith.constant 0 : index
    %c0_4 = arith.constant 0 : index
    %3 = vector.load %arg3[%c0_3, %c0_4] : memref<1x80xf32, #tpu.memory_space<vmem>>, vector<1x80xf32>
    %4 = vector.broadcast %3 : vector<1x80xf32> to vector<8x80xf32>
    %5 = arith.addf %2, %4 : vector<8x80xf32>
    %cst_5 = arith.constant 0.000000e+00 : f32
    %6 = vector.broadcast %cst_5 : f32 to vector<8x80xf32>
    %7 = arith.maximumf %5, %6 : vector<8x80xf32>
    %8 = vector.extract_strided_slice %7 {offsets = [0, 0], sizes = [8, 20], strides = [1, 1]} : vector<8x80xf32> to vector<8x20xf32>
    %9 = vector.extract_strided_slice %7 {offsets = [0, 20], sizes = [8, 20], strides = [1, 1]} : vector<8x80xf32> to vector<8x20xf32>
    %10 = arith.maximumf %8, %9 : vector<8x20xf32>
    %11 = vector.extract_strided_slice %7 {offsets = [0, 40], sizes = [8, 20], strides = [1, 1]} : vector<8x80xf32> to vector<8x20xf32>
    %12 = vector.extract_strided_slice %7 {offsets = [0, 60], sizes = [8, 20], strides = [1, 1]} : vector<8x80xf32> to vector<8x20xf32>
    %13 = arith.maximumf %11, %12 : vector<8x20xf32>
    %14 = arith.maximumf %10, %13 : vector<8x20xf32>
    %c0_6 = arith.constant 0 : index
    %c0_7 = arith.constant 0 : index
    %15 = vector.load %arg4[%c0_6, %c0_7] : memref<20x500xf32, #tpu.memory_space<vmem>>, vector<20x500xf32>
    %cst_8 = arith.constant dense<0.000000e+00> : vector<8x500xf32>
    %16 = tpu.matmul %14, %15, %cst_8 {dimension_numbers = #tpu.dot_dimension_numbers<[1], [0], [0], [1], [0, 0, 1, 1], [], []>} : vector<8x20xf32>, vector<20x500xf32>, vector<8x500xf32> -> vector<8x500xf32>
    %c0_9 = arith.constant 0 : index
    %c0_10 = arith.constant 0 : index
    %17 = vector.load %arg5[%c0_9, %c0_10] : memref<1x500xf32, #tpu.memory_space<vmem>>, vector<1x500xf32>
    %18 = vector.broadcast %17 : vector<1x500xf32> to vector<8x500xf32>
    %19 = arith.addf %16, %18 : vector<8x500xf32>
    %cst_11 = arith.constant 0.000000e+00 : f32
    %20 = vector.broadcast %cst_11 : f32 to vector<8x500xf32>
    %21 = arith.maximumf %19, %20 : vector<8x500xf32>
    %c0_12 = arith.constant 0 : index
    %c0_13 = arith.constant 0 : index
    %22 = vector.load %arg6[%c0_12, %c0_13] : memref<500x2xf32, #tpu.memory_space<vmem>>, vector<500x2xf32>
    %cst_14 = arith.constant dense<0.000000e+00> : vector<8x2xf32>
    %23 = tpu.matmul %21, %22, %cst_14 {dimension_numbers = #tpu.dot_dimension_numbers<[1], [0], [0], [1], [0, 0, 1, 1], [], []>} : vector<8x500xf32>, vector<500x2xf32>, vector<8x2xf32> -> vector<8x2xf32>
    %c0_15 = arith.constant 0 : index
    %c0_16 = arith.constant 0 : index
    %24 = vector.load %arg7[%c0_15, %c0_16] : memref<1x2xf32, #tpu.memory_space<vmem>>, vector<1x2xf32>
    %25 = vector.broadcast %24 : vector<1x2xf32> to vector<8x2xf32>
    %26 = arith.addf %23, %25 : vector<8x2xf32>
    %cst_17 = arith.constant 0.000000e+00 : f32
    %27 = vector.broadcast %cst_17 : f32 to vector<8x2xf32>
    %28 = arith.subf %27, %26 : vector<8x2xf32>
    %29 = math.exp %28 : vector<8x2xf32>
    %cst_18 = arith.constant 1.000000e+00 : f32
    %30 = vector.broadcast %cst_18 : f32 to vector<8x2xf32>
    %31 = arith.addf %30, %29 : vector<8x2xf32>
    %cst_19 = arith.constant 1.000000e+00 : f32
    %32 = vector.broadcast %cst_19 : f32 to vector<8x2xf32>
    %33 = arith.divf %32, %31 : vector<8x2xf32>
    %c0_20 = arith.constant 0 : index
    %c0_21 = arith.constant 0 : index
    %34 = vector.load %arg8[%c0_20, %c0_21] : memref<8x2xf32, #tpu.memory_space<vmem>>, vector<8x2xf32>
    tpu.vector_store %arg8[%c0_20, %c0_21], %33 {strides = array<i32>} : memref<8x2xf32, #tpu.memory_space<vmem>>, vector<8x2xf32>,
    return
  }
  func.func @transform_0(%arg0: i32) -> (i32, i32) {
    %c0_i32 = arith.constant 0 : i32
    %c0_i32_0 = arith.constant 0 : i32
    return %arg0, %c0_i32 : i32, i32
  }
  func.func @transform_1(%arg0: i32) -> (i32, i32) {
    %c0_i32 = arith.constant 0 : i32
    %c0_i32_0 = arith.constant 0 : i32
    %c0_i32_1 = arith.constant 0 : i32
    return %c0_i32, %c0_i32_0 : i32, i32
  }
  func.func @transform_2(%arg0: i32) -> (i32, i32) {
    %c0_i32 = arith.constant 0 : i32
    %c0_i32_0 = arith.constant 0 : i32
    %c0_i32_1 = arith.constant 0 : i32
    return %c0_i32, %c0_i32_0 : i32, i32
  }
  func.func @transform_3(%arg0: i32) -> (i32, i32) {
    %c0_i32 = arith.constant 0 : i32
    %c0_i32_0 = arith.constant 0 : i32
    %c0_i32_1 = arith.constant 0 : i32
    return %c0_i32, %c0_i32_0 : i32, i32
  }
  func.func @transform_4(%arg0: i32) -> (i32, i32) {
    %c0_i32 = arith.constant 0 : i32
    %c0_i32_0 = arith.constant 0 : i32
    %c0_i32_1 = arith.constant 0 : i32
    return %c0_i32, %c0_i32_0 : i32, i32
  }
  func.func @transform_5(%arg0: i32) -> (i32, i32) {
    %c0_i32 = arith.constant 0 : i32
    %c0_i32_0 = arith.constant 0 : i32
    %c0_i32_1 = arith.constant 0 : i32
    return %c0_i32, %c0_i32_0 : i32, i32
  }
  func.func @transform_6(%arg0: i32) -> (i32, i32) {
    %c0_i32 = arith.constant 0 : i32
    %c0_i32_0 = arith.constant 0 : i32
    %c0_i32_1 = arith.constant 0 : i32
    return %c0_i32, %c0_i32_0 : i32, i32
  }
  func.func @transform_7(%arg0: i32) -> (i32, i32) {
    %c0_i32 = arith.constant 0 : i32
    %c0_i32_0 = arith.constant 0 : i32
    return %arg0, %c0_i32 : i32, i32
  }
}

</mosaic_0001>

<llo_original>
// kernel: tpu_custom_call.1
$region0: #{tpu_custom_call.1}
  #allocation0 [shape = 'u32[]', space=smem, size = 0x4, offset = 0x4, fixed_abs, tag = 'smem constant byte address 0x4 - core index']
  #allocation1 [shape = 'u32[72,128]{1,0:T(1,128)}', space=vmem, size = 0x9000, scoped, tag = 'internal scratch']
  %s0 = inlined_call_operand.vmem [shape: f32[8,8], index: 0, kind: input, shape index: {}]
  %s1 = inlined_call_operand.vmem [shape: f32[8,80], index: 1, kind: input, shape index: {}]
  %s2 = inlined_call_operand.vmem [shape: f32[1,80], index: 2, kind: input, shape index: {}]
  %s3 = inlined_call_operand.vmem [shape: f32[20,500], index: 3, kind: input, shape index: {}]
  %s4 = inlined_call_operand.vmem [shape: f32[1,500], index: 4, kind: input, shape index: {}]
  %s5 = inlined_call_operand.vmem [shape: f32[500,2], index: 5, kind: input, shape index: {}]
  %s6 = inlined_call_operand.vmem [shape: f32[1,2], index: 6, kind: input, shape index: {}]
  %s7 = inlined_call_operand.vmem [shape: f32[8,2], index: 7, kind: output, shape index: {}]
  %s8 = sld [smem:[#allocation0]]
  $region38: #{tpu_custom_call.1} parent=0
    _
  %s10 = ssub.s32 1, %s8
  %s11 = scalar_select 0, %s10, %s8
  // Predicated region
  $region2: #{tpu_custom_call.1} parent=0 // pred_check
    _
  $region3: #{tpu_custom_call.1} parent=0 // pred_check_branch
    %13 = sbr.rel (0) target = $region5
  $region4: #{tpu_custom_call.1} parent=0 // pred_region
    _
  $region5: #{tpu_custom_call.1} parent=0 // pred_fallthru
    _
  // Predicated region
  $region6: #{tpu_custom_call.1} parent=0 // pred_check
    _
  $region7: #{tpu_custom_call.1} parent=0 // pred_check_branch
    %15 = sbr.rel (0) target = $region9
  $region8: #{tpu_custom_call.1} parent=0 // pred_region
    _
  $region9: #{tpu_custom_call.1} parent=0 // pred_fallthru
    _
  // Predicated region
  $region10: #{tpu_custom_call.1} parent=0 // pred_check
    _
  $region11: #{tpu_custom_call.1} parent=0 // pred_check_branch
    %17 = sbr.rel (0) target = $region13
  $region12: #{tpu_custom_call.1} parent=0 // pred_region
    _
  $region13: #{tpu_custom_call.1} parent=0 // pred_fallthru
    _
  // Predicated region
  $region14: #{tpu_custom_call.1} parent=0 // pred_check
    _
  $region15: #{tpu_custom_call.1} parent=0 // pred_check_branch
    %19 = sbr.rel (0) target = $region17
  $region16: #{tpu_custom_call.1} parent=0 // pred_region
    _
  $region17: #{tpu_custom_call.1} parent=0 // pred_fallthru
    _
  // Predicated region
  $region18: #{tpu_custom_call.1} parent=0 // pred_check
    _
  $region19: #{tpu_custom_call.1} parent=0 // pred_check_branch
    %21 = sbr.rel (0) target = $region21
  $region20: #{tpu_custom_call.1} parent=0 // pred_region
    _
  $region21: #{tpu_custom_call.1} parent=0 // pred_fallthru
    _
  // Predicated region
  $region22: #{tpu_custom_call.1} parent=0 // pred_check
    _
  $region23: #{tpu_custom_call.1} parent=0 // pred_check_branch
    %23 = sbr.rel (0) target = $region25
  $region24: #{tpu_custom_call.1} parent=0 // pred_region
    _
  $region25: #{tpu_custom_call.1} parent=0 // pred_fallthru
    _
  // Predicated region
  $region26: #{tpu_custom_call.1} parent=0 // pred_check
    _
  $region27: #{tpu_custom_call.1} parent=0 // pred_check_branch
    %25 = sbr.rel (0) target = $region29
  $region28: #{tpu_custom_call.1} parent=0 // pred_region
    _
  $region29: #{tpu_custom_call.1} parent=0 // pred_fallthru
    _
  %v26 = vld [vmem:[%s0] sm:$0xff]
  %v27 = vld [vmem:[%s1] sm:$0xff]
  %v28 = vld [vmem:[%s2] sm:$0x1]
  %v30 = vperm.slane %v28, 0
  %vm32 = vcmask 64512
  %v34 = vsel %vm32, %v26, 0
  %36 = vmatpush.msra.mxu0 0.0
  %37 = vmatpush.msra.mxu0 0.0
  %38 = vmatpush.msra.mxu0 0.0
  %39 = vmatpush.msra.mxu0 0.0
  %40 = vmatpush.msra.mxu0 0.0
  %41 = vmatpush.msra.mxu0 0.0
  %42 = vmatpush.msra.mxu0 0.0
  %43 = vmatpush.msra.mxu0 0.0
  %44 = vmatpush.msra.mxu0 0.0
  %45 = vmatpush.msra.mxu0 0.0
  %46 = vmatpush.msra.mxu0 0.0
  %47 = vmatpush.msra.mxu0 0.0
  %48 = vmatpush.msra.mxu0 0.0
  %49 = vmatpush.msra.mxu0 0.0
  %50 = vmatpush.msra.mxu0 0.0
  %51 = vmatpush.msra.mxu0 %v27
  %52 = vmatmul.f32.gmra.mxu0 %v34
  %v53 = vpop.f32.mrf.mxu0
  %v54 = vadd.f32 %v30, %v53
  %55 = vdwg.mxu0
  %v56 = vmax.f32 %v54, 0.0
  %58 = vrot.lane.b32.xlu0 %v56, 108
  %v59 = vpop.permute.xlu0 %58
  %v61 = vmax.f32 %v56, %v59
  %63 = vrot.lane.b32.xlu0 %v61, 88
  %v64 = vpop.permute.xlu0 %63
  %v66 = vmax.f32 %v61, %v64
  %v67 = vld [vmem:[%s3] sm:$0xff]
  %v68 = vld [vmem:[%s3 + $0x8] sm:$0xff]
  %v69 = vld [vmem:[%s3 + $0x10] sm:$0xff]
  %v70 = vld [vmem:[%s3 + $0x18] sm:$0xff]
  %v71 = vld [vmem:[%s3 + $0x20] sm:$0xff]
  %v72 = vld [vmem:[%s3 + $0x28] sm:$0xff]
  %v73 = vld [vmem:[%s3 + $0x30] sm:$0xff]
  %v74 = vld [vmem:[%s3 + $0x38] sm:$0xff]
  %v75 = vld [vmem:[%s3 + $0x40] sm:$0xf]
  %v76 = vld [vmem:[%s3 + $0x48] sm:$0xf]
  %v77 = vld [vmem:[%s3 + $0x50] sm:$0xf]
  %v78 = vld [vmem:[%s3 + $0x58] sm:$0xf]
  %v79 = vld [vmem:[%s4] sm:$0xf]
  %v81 = vperm.slane %v79, 0
  %v82 = vperm.slane %v79, 1
  %v83 = vperm.slane %v79, 2
  %v84 = vperm.slane %v79, 3
  %vm89 = vcmask 162816
  %v91 = vsel %vm89, %v66, 0
  %vm93 = vcmask 1043456
  %v95 = vsel %vm93, %v75, 0
  %v98 = vsel %vm93, %v76, 0
  %v101 = vsel %vm93, %v77, 0
  %v104 = vsel %vm93, %v78, 0
  %106 = vmatpush.msra.mxu0 0.0
  %107 = vmatpush.msra.mxu0 0.0
  %108 = vmatpush.msra.mxu0 0.0
  %109 = vmatpush.msra.mxu0 0.0
  %110 = vmatpush.msra.mxu0 0.0
  %111 = vmatpush.msra.mxu0 0.0
  %112 = vmatpush.msra.mxu0 0.0
  %113 = vmatpush.msra.mxu0 0.0
  %114 = vmatpush.msra.mxu0 0.0
  %115 = vmatpush.msra.mxu0 0.0
  %116 = vmatpush.msra.mxu0 0.0
  %117 = vmatpush.msra.mxu0 0.0
  %118 = vmatpush.msra.mxu0 0.0
  %119 = vmatpush.msra.mxu0 %v95
  %120 = vmatpush.msra.mxu0 %v71
  %121 = vmatpush.msra.mxu0 %v67
  %122 = vmatmul.f32.gmra.mxu0 %v91
  %v123 = vpop.f32.mrf.mxu0
  %v124 = vadd.f32 %v81, %v123
  %125 = vdwg.mxu0
  %126 = vmatpush.msra.mxu0 0.0
  %127 = vmatpush.msra.mxu0 0.0
  %128 = vmatpush.msra.mxu0 0.0
  %129 = vmatpush.msra.mxu0 0.0
  %130 = vmatpush.msra.mxu0 0.0
  %131 = vmatpush.msra.mxu0 0.0
  %132 = vmatpush.msra.mxu0 0.0
  %133 = vmatpush.msra.mxu0 0.0
  %134 = vmatpush.msra.mxu0 0.0
  %135 = vmatpush.msra.mxu0 0.0
  %136 = vmatpush.msra.mxu0 0.0
  %137 = vmatpush.msra.mxu0 0.0
  %138 = vmatpush.msra.mxu0 0.0
  %139 = vmatpush.msra.mxu0 %v98
  %140 = vmatpush.msra.mxu0 %v72
  %141 = vmatpush.msra.mxu0 %v68
  %142 = vmatmul.f32.gmra.mxu0 %v91
  %v143 = vpop.f32.mrf.mxu0
  %v144 = vadd.f32 %v82, %v143
  %145 = vdwg.mxu0
  %146 = vmatpush.msra.mxu0 0.0
  %147 = vmatpush.msra.mxu0 0.0
  %148 = vmatpush.msra.mxu0 0.0
  %149 = vmatpush.msra.mxu0 0.0
  %150 = vmatpush.msra.mxu0 0.0
  %151 = vmatpush.msra.mxu0 0.0
  %152 = vmatpush.msra.mxu0 0.0
  %153 = vmatpush.msra.mxu0 0.0
  %154 = vmatpush.msra.mxu0 0.0
  %155 = vmatpush.msra.mxu0 0.0
  %156 = vmatpush.msra.mxu0 0.0
  %157 = vmatpush.msra.mxu0 0.0
  %158 = vmatpush.msra.mxu0 0.0
  %159 = vmatpush.msra.mxu0 %v101
  %160 = vmatpush.msra.mxu0 %v73
  %161 = vmatpush.msra.mxu0 %v69
  %162 = vmatmul.f32.gmra.mxu0 %v91
  %v163 = vpop.f32.mrf.mxu0
  %v164 = vadd.f32 %v83, %v163
  %165 = vdwg.mxu0
  %166 = vmatpush.msra.mxu0 0.0
  %167 = vmatpush.msra.mxu0 0.0
  %168 = vmatpush.msra.mxu0 0.0
  %169 = vmatpush.msra.mxu0 0.0
  %170 = vmatpush.msra.mxu0 0.0
  %171 = vmatpush.msra.mxu0 0.0
  %172 = vmatpush.msra.mxu0 0.0
  %173 = vmatpush.msra.mxu0 0.0
  %174 = vmatpush.msra.mxu0 0.0
  %175 = vmatpush.msra.mxu0 0.0
  %176 = vmatpush.msra.mxu0 0.0
  %177 = vmatpush.msra.mxu0 0.0
  %178 = vmatpush.msra.mxu0 0.0
  %179 = vmatpush.msra.mxu0 %v104
  %180 = vmatpush.msra.mxu0 %v74
  %181 = vmatpush.msra.mxu0 %v70
  %182 = vmatmul.f32.gmra.mxu0 %v91
  %v183 = vpop.f32.mrf.mxu0
  %v184 = vadd.f32 %v84, %v183
  %185 = vdwg.mxu0
  %v186 = vmax.f32 %v124, 0.0
  %v187 = vmax.f32 %v144, 0.0
  %v188 = vmax.f32 %v164, 0.0
  %v189 = vmax.f32 %v184, 0.0
  %v190 = vld [vmem:[%s5] sm:$0xff]
  %v191 = vld [vmem:[%s5 + $0x8] sm:$0xff]
  %v192 = vld [vmem:[%s5 + $0x10] sm:$0xff]
  %v193 = vld [vmem:[%s5 + $0x18] sm:$0xff]
  %v194 = vld [vmem:[%s5 + $0x20] sm:$0xff]
  %v195 = vld [vmem:[%s5 + $0x28] sm:$0xff]
  %v196 = vld [vmem:[%s5 + $0x30] sm:$0xff]
  %v197 = vld [vmem:[%s5 + $0x38] sm:$0xff]
  %v198 = vld [vmem:[%s5 + $0x40] sm:$0xff]
  %v199 = vld [vmem:[%s5 + $0x48] sm:$0xff]
  %v200 = vld [vmem:[%s5 + $0x50] sm:$0xff]
  %v201 = vld [vmem:[%s5 + $0x58] sm:$0xff]
  %v202 = vld [vmem:[%s5 + $0x60] sm:$0xff]
  %v203 = vld [vmem:[%s5 + $0x68] sm:$0xff]
  %v204 = vld [vmem:[%s5 + $0x70] sm:$0xff]
  %v205 = vld [vmem:[%s5 + $0x78] sm:$0xff]
  %v206 = vld [vmem:[%s5 + $0x80] sm:$0xff]
  %v207 = vld [vmem:[%s5 + $0x88] sm:$0xff]
  %v208 = vld [vmem:[%s5 + $0x90] sm:$0xff]
  %v209 = vld [vmem:[%s5 + $0x98] sm:$0xff]
  %v210 = vld [vmem:[%s5 + $0xa0] sm:$0xff]
  %v211 = vld [vmem:[%s5 + $0xa8] sm:$0xff]
  %v212 = vld [vmem:[%s5 + $0xb0] sm:$0xff]
  %v213 = vld [vmem:[%s5 + $0xb8] sm:$0xff]
  %v214 = vld [vmem:[%s5 + $0xc0] sm:$0xff]
  %v215 = vld [vmem:[%s5 + $0xc8] sm:$0xff]
  %v216 = vld [vmem:[%s5 + $0xd0] sm:$0xff]
  %v217 = vld [vmem:[%s5 + $0xd8] sm:$0xff]
  %v218 = vld [vmem:[%s5 + $0xe0] sm:$0xff]
  %v219 = vld [vmem:[%s5 + $0xe8] sm:$0xff]
  %v220 = vld [vmem:[%s5 + $0xf0] sm:$0xff]
  %v221 = vld [vmem:[%s5 + $0xf8] sm:$0xff]
  %v222 = vld [vmem:[%s5 + $0x100] sm:$0xff]
  %v223 = vld [vmem:[%s5 + $0x108] sm:$0xff]
  %v224 = vld [vmem:[%s5 + $0x110] sm:$0xff]
  %v225 = vld [vmem:[%s5 + $0x118] sm:$0xff]
  %v226 = vld [vmem:[%s5 + $0x120] sm:$0xff]
  %v227 = vld [vmem:[%s5 + $0x128] sm:$0xff]
  %v228 = vld [vmem:[%s5 + $0x130] sm:$0xff]
  %v229 = vld [vmem:[%s5 + $0x138] sm:$0xff]
  %v230 = vld [vmem:[%s5 + $0x140] sm:$0xff]
  %v231 = vld [vmem:[%s5 + $0x148] sm:$0xff]
  %v232 = vld [vmem:[%s5 + $0x150] sm:$0xff]
  %v233 = vld [vmem:[%s5 + $0x158] sm:$0xff]
  %v234 = vld [vmem:[%s5 + $0x160] sm:$0xff]
  %v235 = vld [vmem:[%s5 + $0x168] sm:$0xff]
  %v236 = vld [vmem:[%s5 + $0x170] sm:$0xff]
  %v237 = vld [vmem:[%s5 + $0x178] sm:$0xff]
  %v238 = vld [vmem:[%s5 + $0x180] sm:$0xff]
  %v239 = vld [vmem:[%s5 + $0x188] sm:$0xff]
  %v240 = vld [vmem:[%s5 + $0x190] sm:$0xff]
  %v241 = vld [vmem:[%s5 + $0x198] sm:$0xff]
  %v242 = vld [vmem:[%s5 + $0x1a0] sm:$0xff]
  %v243 = vld [vmem:[%s5 + $0x1a8] sm:$0xff]
  %v244 = vld [vmem:[%s5 + $0x1b0] sm:$0xff]
  %v245 = vld [vmem:[%s5 + $0x1b8] sm:$0xff]
  %v246 = vld [vmem:[%s5 + $0x1c0] sm:$0xff]
  %v247 = vld [vmem:[%s5 + $0x1c8] sm:$0xff]
  %v248 = vld [vmem:[%s5 + $0x1d0] sm:$0xff]
  %v249 = vld [vmem:[%s5 + $0x1d8] sm:$0xff]
  %v250 = vld [vmem:[%s5 + $0x1e0] sm:$0xff]
  %v251 = vld [vmem:[%s5 + $0x1e8] sm:$0xff]
  %v252 = vld [vmem:[%s5 + $0x1f0] sm:$0xf]
  %v253 = vld [vmem:[%s6] sm:$0x1]
  %v255 = vperm.slane %v253, 0
  %vm257 = vcmask 949248
  %v259 = vsel %vm257, %v189, 0
  %v262 = vsel %vm93, %v252, 0
  %264 = vmatpush.msra.mxu0 %v205
  %265 = vmatpush.msra.mxu0 %v204
  %266 = vmatpush.msra.mxu0 %v203
  %267 = vmatpush.msra.mxu0 %v202
  %268 = vmatpush.msra.mxu0 %v201
  %269 = vmatpush.msra.mxu0 %v200
  %270 = vmatpush.msra.mxu0 %v199
  %271 = vmatpush.msra.mxu0 %v198
  %272 = vmatpush.msra.mxu0 %v197
  %273 = vmatpush.msra.mxu0 %v196
  %274 = vmatpush.msra.mxu0 %v195
  %275 = vmatpush.msra.mxu0 %v194
  %276 = vmatpush.msra.mxu0 %v193
  %277 = vmatpush.msra.mxu0 %v192
  %278 = vmatpush.msra.mxu0 %v191
  %279 = vmatpush.msra.mxu0 %v190
  %280 = vmatmul.f32.gmra.mxu0 %v186
  %v281 = vpop.f32.mrf.mxu0
  %v282 = vadd.f32 %v255, %v281
  %283 = vdwg.mxu0
  %284 = vmatpush.msra.mxu0 %v221
  %285 = vmatpush.msra.mxu0 %v220
  %286 = vmatpush.msra.mxu0 %v219
  %287 = vmatpush.msra.mxu0 %v218
  %288 = vmatpush.msra.mxu0 %v217
  %289 = vmatpush.msra.mxu0 %v216
  %290 = vmatpush.msra.mxu0 %v215
  %291 = vmatpush.msra.mxu0 %v214
  %292 = vmatpush.msra.mxu0 %v213
  %293 = vmatpush.msra.mxu0 %v212
  %294 = vmatpush.msra.mxu0 %v211
  %295 = vmatpush.msra.mxu0 %v210
  %296 = vmatpush.msra.mxu0 %v209
  %297 = vmatpush.msra.mxu0 %v208
  %298 = vmatpush.msra.mxu0 %v207
  %299 = vmatpush.msra.mxu0 %v206
  %300 = vmatmul.f32.gmra.mxu0 %v187
  %v301 = vpop.f32.mrf.mxu0
  %v302 = vadd.f32 %v282, %v301
  %303 = vdwg.mxu0
  %304 = vmatpush.msra.mxu0 %v237
  %305 = vmatpush.msra.mxu0 %v236
  %306 = vmatpush.msra.mxu0 %v235
  %307 = vmatpush.msra.mxu0 %v234
  %308 = vmatpush.msra.mxu0 %v233
  %309 = vmatpush.msra.mxu0 %v232
  %310 = vmatpush.msra.mxu0 %v231
  %311 = vmatpush.msra.mxu0 %v230
  %312 = vmatpush.msra.mxu0 %v229
  %313 = vmatpush.msra.mxu0 %v228
  %314 = vmatpush.msra.mxu0 %v227
  %315 = vmatpush.msra.mxu0 %v226
  %316 = vmatpush.msra.mxu0 %v225
  %317 = vmatpush.msra.mxu0 %v224
  %318 = vmatpush.msra.mxu0 %v223
  %319 = vmatpush.msra.mxu0 %v222
  %320 = vmatmul.f32.gmra.mxu0 %v188
  %v321 = vpop.f32.mrf.mxu0
  %v322 = vadd.f32 %v302, %v321
  %323 = vdwg.mxu0
  %324 = vmatpush.msra.mxu0 0.0
  %325 = vmatpush.msra.mxu0 %v262
  %326 = vmatpush.msra.mxu0 %v251
  %327 = vmatpush.msra.mxu0 %v250
  %328 = vmatpush.msra.mxu0 %v249
  %329 = vmatpush.msra.mxu0 %v248
  %330 = vmatpush.msra.mxu0 %v247
  %331 = vmatpush.msra.mxu0 %v246
  %332 = vmatpush.msra.mxu0 %v245
  %333 = vmatpush.msra.mxu0 %v244
  %334 = vmatpush.msra.mxu0 %v243
  %335 = vmatpush.msra.mxu0 %v242
  %336 = vmatpush.msra.mxu0 %v241
  %337 = vmatpush.msra.mxu0 %v240
  %338 = vmatpush.msra.mxu0 %v239
  %339 = vmatpush.msra.mxu0 %v238
  %340 = vmatmul.f32.gmra.mxu0 %v259
  %v341 = vpop.f32.mrf.mxu0
  %v342 = vadd.f32 %v322, %v341
  %343 = vdwg.mxu0
  %v344 = vsub.f32 0.0, %v342
  %v345 = vmul.f32 %v344, 1.442695
  %v346 = vpow.pop %v345
  %v347 = vadd.f32 %v346, 1.0
  %v348 = vrcp.pop %v347
  %v349 = vmul.f32 %v347, %v348
  %v350 = vsub.f32 1.0, %v349
  %v351 = vmul.f32 %v348, %v350
  %v352 = vadd.f32 %v348, %v351
  %vm353 = vweird.f32 %v347
  %vm354 = vweird.f32 %v348
  %vm355 = vmor %vm353, %vm354
  %v356 = vsel %vm355, %v348, %v352
  %v357 = vand.u32 2147483647, %v347
  %vm358 = vcmp.eq.f32.partialorder %v357, 8.507059e+37
  %v359 = vand.u32 %v347, 2147483648
  %v360 = vor.u32 1.1754944e-38, %v359
  %v361 = vsel %vm358, %v360, %v356
  %v362 = vmul.f32 1.0, %v361
  %vm363 = vcmask 15360
  %364 = vst.msk [vmem:[%s7] sm:$0xff] %vm363, %v362
  // Predicated region
  $region30: #{tpu_custom_call.1} parent=0 // pred_check
    _
  $region31: #{tpu_custom_call.1} parent=0 // pred_check_branch
    %366 = sbr.rel (0) target = $region33
  $region32: #{tpu_custom_call.1} parent=0 // pred_region
    _
  $region33: #{tpu_custom_call.1} parent=0 // pred_fallthru
    _
  // Predicated region
  $region34: #{tpu_custom_call.1} parent=0 // pred_check
    _
  $region35: #{tpu_custom_call.1} parent=0 // pred_check_branch
    %368 = sbr.rel (0) target = $region37
  $region36: #{tpu_custom_call.1} parent=0 // pred_region
    _
  $region37: #{tpu_custom_call.1} parent=0 // pred_fallthru
    _

</llo_original>
